<compile_context>
chip_gen: v7x
topology: tpu7x:2x2x1
jax: 0.10.0
libtpu: 0.0.40
codegen_flags: <defaults>
</compile_context>

<pallas_src>
import functools

import jax
import jax.numpy as jnp
from jax.experimental import pallas as pl
from jax.experimental.pallas import tpu as pltpu


def _round_up(x: int, m: int) -> int:
    return (x + m - 1) // m * m


def _apply_act(y, act_fn: str, gelu_approximate: bool = False):
    """Activation in f32. Uses only exp/log/tanh formulations (EUP friendly)."""
    if act_fn == "silu":
        # x * sigmoid(x); manual sigmoid keeps kernel/reference bit-identical.
        return y * (1.0 / (1.0 + jnp.exp(-y)))
    if act_fn == "mish":
        # mish(x) = x * tanh(softplus(x)); stable softplus without log1p.
        sp = jnp.maximum(y, 0.0) + jnp.log(1.0 + jnp.exp(-jnp.abs(y)))
        return y * jnp.tanh(sp)
    if act_fn == "gelu":
        # PyTorch nn.GELU() default is exact (erf); approximate=True -> tanh form
        # (cheaper on v5e if tolerance allows).
        return jax.nn.gelu(y, approximate=gelu_approximate)
    raise ValueError(f"unknown act_fn {act_fn}")


def _fused_mlp_kernel(x_ref, w0_ref, wr_ref, b_ref, o_ref, *,
                      num_fcs, act_fn, post_act_fn, layer_acts,
                      compute_dtype, gelu_approximate):
    """Whole MLP for one batch tile.

    x_ref : (TB, Cin_p)              input tile (lane-padded)
    w0_ref: (Cin_p, Cout_p)          layer-0 weight (bf16, lane-padded)
    wr_ref: (max(num_fcs-1,1), Cout_p, Cout_p)  stacked remaining weights
    b_ref : (num_fcs, Cout_p)        stacked biases (f32)
    o_ref : (TB, Cout_p)             output tile (lane-dense store)
    """
    biases = b_ref[...].astype(jnp.float32)            # (num_fcs, Cout_p)

    # Layer 0: matmul on the MXU (bf16 operands, f32 accumulation).
    h = jnp.dot(x_ref[...].astype(compute_dtype), w0_ref[...],
                preferred_element_type=jnp.float32)
    h = h + biases[0:1, :]
    if layer_acts[0]:
        h = _apply_act(h, act_fn, gelu_approximate)

    # Remaining layers, fully unrolled (num_fcs is a compile-time constant),
    # activations never leave vregs.
    for i in range(1, num_fcs):
        h = jnp.dot(h.astype(compute_dtype), wr_ref[i - 1],
                    preferred_element_type=jnp.float32)
        h = h + biases[i:i + 1, :]
        if layer_acts[i]:
            h = _apply_act(h, act_fn, gelu_approximate)

    # Post-activation fused into the same kernel (data already in vregs).
    if post_act_fn is not None:
        h = _apply_act(h, post_act_fn, gelu_approximate)

    o_ref[...] = h.astype(o_ref.dtype)


class NoiseMapping:
    """JAX/Pallas port of the PyTorch NoiseMapping module (fused forward)."""

    def __init__(self, in_channels: int, out_channels: int = None,
                 act_fn: str = "silu", num_fcs: int = None,
                 post_act_fn=None, key=None,
                 compute_dtype=jnp.bfloat16, gelu_approximate: bool = False):
        if act_fn not in ("silu", "mish", "gelu"):
            raise ValueError(f"{act_fn} does not exist.")
        if post_act_fn is not None and post_act_fn not in ("silu", "mish", "gelu"):
            raise ValueError(f"{post_act_fn} does not exist.")
        self.act_fn = act_fn
        self.post_act_fn = post_act_fn
        self.num_fcs = num_fcs
        self.in_channels = in_channels
        self.out_channels = out_channels
        self.compute_dtype = compute_dtype
        self.gelu_approximate = gelu_approximate

        if key is None:
            key = jax.random.PRNGKey(0)

        # Deterministic init (uniform 1/sqrt(fan_in), like PyTorch Linear).
        # Weights stored as (in, out) so the kernel computes y = x @ W + b.
        self.weights = []
        self.biases = []
        self.layer_acts = []
        for i in range(num_fcs):
            fin = in_channels if i == 0 else out_channels
            fout = out_channels
            key, wk, bk = jax.random.split(key, 3)
            bound = 1.0 / (fin ** 0.5)
            w = jax.random.uniform(wk, (fin, fout), jnp.float32,
                                   minval=-bound, maxval=bound)
            b = jax.random.uniform(bk, (fout,), jnp.float32,
                                   minval=-bound, maxval=bound)
            self.weights.append(w)
            self.biases.append(b)
            # PyTorch: act after every layer except the last (unless num_fcs==1,
            # where the single layer hits the `i == 0` branch and gets the act).
            self.layer_acts.append((i == 0) or (i != num_fcs - 1))
        self.layer_acts = tuple(self.layer_acts)

        # --- Pre-padded / pre-stacked kernel parameters (hoisted out of the
        # --- hot path): lane-pad channels to multiples of 128, cast weights to
        # --- the MXU compute dtype, stack middle/last weights and all biases.
        self.cin_p = _round_up(in_channels, 128)
        self.cout_p = _round_up(out_channels, 128)

        w0_p = jnp.zeros((self.cin_p, self.cout_p), jnp.float32)
        w0_p = w0_p.at[:in_channels, :out_channels].set(self.weights[0])
        self.w0_p = w0_p.astype(compute_dtype)

        n_rest = max(num_fcs - 1, 1)   # keep a dummy (zero) slab if num_fcs == 1
        wr_p = jnp.zeros((n_rest, self.cout_p, self.cout_p), jnp.float32)
        for i in range(1, num_fcs):
            wr_p = wr_p.at[i - 1, :out_channels, :out_channels].set(self.weights[i])
        self.wr_p = wr_p.astype(compute_dtype)

        b_p = jnp.zeros((num_fcs, self.cout_p), jnp.float32)
        for i in range(num_fcs):
            b_p = b_p.at[i, :out_channels].set(self.biases[i])
        self.b_p = b_p

    def __call__(self, sample):
        orig_shape = sample.shape
        x = sample.reshape(-1, orig_shape[-1])
        batch = x.shape[0]

        # Batch tile: modest size so (x + out tiles, double-buffered, + weights)
        # stays far under the 32 MiB scoped-VMEM default (and v7x's 64 MiB).
        tb = min(512, _round_up(max(batch, 1), 8))
        b_pad = _round_up(batch, tb)
        grid = (b_pad // tb,)

        # Zero-pad batch (to the tile) and channels (to 128 lanes). Padded
        # weight rows/cols are zero so padded lanes carry exact zeros through
        # every layer and are sliced off at the end.
        x_p = jnp.zeros((b_pad, self.cin_p), x.dtype)
        x_p = x_p.at[:batch, :orig_shape[-1]].set(x)

        kernel = functools.partial(
            _fused_mlp_kernel,
            num_fcs=self.num_fcs,
            act_fn=self.act_fn,
            post_act_fn=self.post_act_fn,
            layer_acts=self.layer_acts,
            compute_dtype=self.compute_dtype,
            gelu_approximate=self.gelu_approximate,
        )

        n_rest = self.wr_p.shape[0]
        out_p = pl.pallas_call(
            kernel,
            out_shape=jax.ShapeDtypeStruct((b_pad, self.cout_p), sample.dtype),
            grid=grid,
            in_specs=[
                pl.BlockSpec((tb, self.cin_p), lambda i: (i, 0)),
                pl.BlockSpec((self.cin_p, self.cout_p), lambda i: (0, 0)),
                pl.BlockSpec((n_rest, self.cout_p, self.cout_p),
                             lambda i: (0, 0, 0)),
                pl.BlockSpec((self.num_fcs, self.cout_p), lambda i: (0, 0)),
            ],
            out_specs=pl.BlockSpec((tb, self.cout_p), lambda i: (i, 0)),
            compiler_params=pltpu.CompilerParams(
                dimension_semantics=("parallel",)),
        )(x_p, self.w0_p, self.wr_p, self.b_p)

        out = out_p[:batch, :self.out_channels]
        return out.reshape(orig_shape[:-1] + (self.out_channels,))


def _reference_forward(module: NoiseMapping, sample):
    """Pure-JAX reference (same bf16-operand / f32-accumulate matmul recipe)."""
    x = sample.reshape(-1, sample.shape[-1]).astype(jnp.float32)
    for i, (w, b) in enumerate(zip(module.weights, module.biases)):
        x = jnp.dot(x.astype(module.compute_dtype),
                    w.astype(module.compute_dtype),
                    preferred_element_type=jnp.float32) + b
        if module.layer_acts[i]:
            x = _apply_act(x, module.act_fn, module.gelu_approximate)
    if module.post_act_fn is not None:
        x = _apply_act(x, module.post_act_fn, module.gelu_approximate)
    x = x.astype(sample.dtype)
    return x.reshape(sample.shape[:-1] + (module.out_channels,))


if __name__ == "__main__":
    key = jax.random.PRNGKey(0)
    batch, in_channels, out_channels, num_fcs = 8, 32, 64, 3

    sample = jax.random.normal(key, (batch, in_channels), jnp.float32)

    # 1) silu MLP, no post-activation (original test configuration).
    module = NoiseMapping(in_channels, out_channels, act_fn="silu",
                          num_fcs=num_fcs, post_act_fn=None,
                          key=jax.random.PRNGKey(42))
    out = jax.block_until_ready(module(sample))
    ref = _reference_forward(module, sample)
    assert out.shape == (batch, out_channels)
    assert jnp.allclose(out, ref, atol=2e-3, rtol=2e-3), "mismatch vs reference (silu)"

    # 2) mish MLP with a fused post-activation (exercises the post_act path).
    module2 = NoiseMapping(in_channels, out_channels, act_fn="mish",
                           num_fcs=2, post_act_fn="silu",
                           key=jax.random.PRNGKey(7))
    out2 = jax.block_until_ready(module2(sample))
    ref2 = _reference_forward(module2, sample)
    assert out2.shape == (batch, out_channels)
    assert jnp.allclose(out2, ref2, atol=2e-3, rtol=2e-3), "mismatch vs reference (mish+post)"

    print("KERNEL_OK")
</pallas_src>

<mosaic_0001>
module attributes {stable_mosaic.version = 11 : i64} {
  func.func @_fused_mlp_kernel(%arg0: i32, %arg1: memref<8x128xf32, #tpu.memory_space<vmem>>, %arg2: memref<128x128xbf16, #tpu.memory_space<vmem>>, %arg3: memref<2x128x128xbf16, #tpu.memory_space<vmem>>, %arg4: memref<3x128xf32, #tpu.memory_space<vmem>>, %arg5: memref<8x128xf32, #tpu.memory_space<vmem>>) attributes {dimension_semantics = [#tpu.dimension_semantics<parallel>], iteration_bounds = array<i64: 1>, scalar_prefetch = 0 : i64, scratch_operands = 0 : i64, tpu.core_type = #tpu.core_type<tc>, window_params = [{transform_indices = @transform_0, window_bounds = array<i64: 8, 128>}, {pipeline_mode = #tpu.pipeline_mode<synchronous>, transform_indices = @transform_1, window_bounds = array<i64: 128, 128>}, {pipeline_mode = #tpu.pipeline_mode<synchronous>, transform_indices = @transform_2, window_bounds = array<i64: 2, 128, 128>}, {pipeline_mode = #tpu.pipeline_mode<synchronous>, transform_indices = @transform_3, window_bounds = array<i64: 3, 128>}, {transform_indices = @transform_4, window_bounds = array<i64: 8, 128>}]} {
    %c0 = arith.constant 0 : index
    %c0_0 = arith.constant 0 : index
    %0 = vector.load %arg4[%c0, %c0_0] : memref<3x128xf32, #tpu.memory_space<vmem>>, vector<3x128xf32>
    %c0_1 = arith.constant 0 : index
    %c0_2 = arith.constant 0 : index
    %1 = vector.load %arg1[%c0_1, %c0_2] : memref<8x128xf32, #tpu.memory_space<vmem>>, vector<8x128xf32>
    %2 = arith.truncf %1 : vector<8x128xf32> to vector<8x128xbf16>
    %c0_3 = arith.constant 0 : index
    %c0_4 = arith.constant 0 : index
    %3 = vector.load %arg2[%c0_3, %c0_4] : memref<128x128xbf16, #tpu.memory_space<vmem>>, vector<128x128xbf16>
    %cst = arith.constant dense<0.000000e+00> : vector<8x128xf32>
    %4 = tpu.matmul %2, %3, %cst {dimension_numbers = #tpu.dot_dimension_numbers<[1], [0], [0], [1], [0, 0, 1, 1], [], []>} : vector<8x128xbf16>, vector<128x128xbf16>, vector<8x128xf32> -> vector<8x128xf32>
    %5 = vector.extract_strided_slice %0 {offsets = [0, 0], sizes = [1, 128], strides = [1, 1]} : vector<3x128xf32> to vector<1x128xf32>
    %6 = vector.broadcast %5 : vector<1x128xf32> to vector<8x128xf32>
    %7 = arith.addf %4, %6 : vector<8x128xf32>
    %cst_5 = arith.constant 0.000000e+00 : f32
    %8 = vector.broadcast %cst_5 : f32 to vector<8x128xf32>
    %9 = arith.subf %8, %7 : vector<8x128xf32>
    %10 = math.exp %9 : vector<8x128xf32>
    %cst_6 = arith.constant 1.000000e+00 : f32
    %11 = vector.broadcast %cst_6 : f32 to vector<8x128xf32>
    %12 = arith.addf %11, %10 : vector<8x128xf32>
    %cst_7 = arith.constant 1.000000e+00 : f32
    %13 = vector.broadcast %cst_7 : f32 to vector<8x128xf32>
    %14 = arith.divf %13, %12 : vector<8x128xf32>
    %15 = arith.mulf %7, %14 : vector<8x128xf32>
    %16 = arith.truncf %15 : vector<8x128xf32> to vector<8x128xbf16>
    %c0_8 = arith.constant 0 : index
    %c0_9 = arith.constant 0 : index
    %c0_10 = arith.constant 0 : index
    %17 = vector.load %arg3[%c0_8, %c0_9, %c0_10] : memref<2x128x128xbf16, #tpu.memory_space<vmem>>, vector<1x128x128xbf16>
    %18 = vector.shape_cast %17 : vector<1x128x128xbf16> to vector<128x128xbf16>
    %cst_11 = arith.constant dense<0.000000e+00> : vector<8x128xf32>
    %19 = tpu.matmul %16, %18, %cst_11 {dimension_numbers = #tpu.dot_dimension_numbers<[1], [0], [0], [1], [0, 0, 1, 1], [], []>} : vector<8x128xbf16>, vector<128x128xbf16>, vector<8x128xf32> -> vector<8x128xf32>
    %20 = vector.extract_strided_slice %0 {offsets = [1, 0], sizes = [1, 128], strides = [1, 1]} : vector<3x128xf32> to vector<1x128xf32>
    %21 = vector.broadcast %20 : vector<1x128xf32> to vector<8x128xf32>
    %22 = arith.addf %19, %21 : vector<8x128xf32>
    %cst_12 = arith.constant 0.000000e+00 : f32
    %23 = vector.broadcast %cst_12 : f32 to vector<8x128xf32>
    %24 = arith.subf %23, %22 : vector<8x128xf32>
    %25 = math.exp %24 : vector<8x128xf32>
    %cst_13 = arith.constant 1.000000e+00 : f32
    %26 = vector.broadcast %cst_13 : f32 to vector<8x128xf32>
    %27 = arith.addf %26, %25 : vector<8x128xf32>
    %cst_14 = arith.constant 1.000000e+00 : f32
    %28 = vector.broadcast %cst_14 : f32 to vector<8x128xf32>
    %29 = arith.divf %28, %27 : vector<8x128xf32>
    %30 = arith.mulf %22, %29 : vector<8x128xf32>
    %31 = arith.truncf %30 : vector<8x128xf32> to vector<8x128xbf16>
    %c1 = arith.constant 1 : index
    %c0_15 = arith.constant 0 : index
    %c0_16 = arith.constant 0 : index
    %32 = vector.load %arg3[%c1, %c0_15, %c0_16] : memref<2x128x128xbf16, #tpu.memory_space<vmem>>, vector<1x128x128xbf16>
    %33 = vector.shape_cast %32 : vector<1x128x128xbf16> to vector<128x128xbf16>
    %cst_17 = arith.constant dense<0.000000e+00> : vector<8x128xf32>
    %34 = tpu.matmul %31, %33, %cst_17 {dimension_numbers = #tpu.dot_dimension_numbers<[1], [0], [0], [1], [0, 0, 1, 1], [], []>} : vector<8x128xbf16>, vector<128x128xbf16>, vector<8x128xf32> -> vector<8x128xf32>
    %35 = vector.extract_strided_slice %0 {offsets = [2, 0], sizes = [1, 128], strides = [1, 1]} : vector<3x128xf32> to vector<1x128xf32>
    %36 = vector.broadcast %35 : vector<1x128xf32> to vector<8x128xf32>
    %37 = arith.addf %34, %36 : vector<8x128xf32>
    %c0_18 = arith.constant 0 : index
    %c0_19 = arith.constant 0 : index
    %38 = vector.load %arg5[%c0_18, %c0_19] : memref<8x128xf32, #tpu.memory_space<vmem>>, vector<8x128xf32>
    tpu.vector_store %arg5[%c0_18, %c0_19], %37 {strides = array<i32>} : memref<8x128xf32, #tpu.memory_space<vmem>>, vector<8x128xf32>,
    return
  }
  func.func @transform_0(%arg0: i32) -> (i32, i32) {
    %c0_i32 = arith.constant 0 : i32
    %c0_i32_0 = arith.constant 0 : i32
    return %arg0, %c0_i32 : i32, i32
  }
  func.func @transform_1(%arg0: i32) -> (i32, i32) {
    %c0_i32 = arith.constant 0 : i32
    %c0_i32_0 = arith.constant 0 : i32
    %c0_i32_1 = arith.constant 0 : i32
    return %c0_i32, %c0_i32_0 : i32, i32
  }
  func.func @transform_2(%arg0: i32) -> (i32, i32, i32) {
    %c0_i32 = arith.constant 0 : i32
    %c0_i32_0 = arith.constant 0 : i32
    %c0_i32_1 = arith.constant 0 : i32
    %c0_i32_2 = arith.constant 0 : i32
    return %c0_i32, %c0_i32_0, %c0_i32_1 : i32, i32, i32
  }
  func.func @transform_3(%arg0: i32) -> (i32, i32) {
    %c0_i32 = arith.constant 0 : i32
    %c0_i32_0 = arith.constant 0 : i32
    %c0_i32_1 = arith.constant 0 : i32
    return %c0_i32, %c0_i32_0 : i32, i32
  }
  func.func @transform_4(%arg0: i32) -> (i32, i32) {
    %c0_i32 = arith.constant 0 : i32
    %c0_i32_0 = arith.constant 0 : i32
    return %arg0, %c0_i32 : i32, i32
  }
}

</mosaic_0001>

<llo_original>
// kernel: tpu_custom_call.1
$region0: #{tpu_custom_call.1}
  #allocation0 [shape = 'u32[]', space=smem, size = 0x4, offset = 0x4, fixed_abs, tag = 'smem constant byte address 0x4 - core index']
  #allocation1 [shape = 'u32[144,128]{1,0:T(1,128)}', space=vmem, size = 0x12000, scoped, tag = 'internal scratch']
  %s0 = inlined_call_operand.hbm [shape: f32[8,128], index: 0, kind: input, shape index: {}]
  %s1 = inlined_call_operand.hbm [shape: bf16[128,128], index: 1, kind: input, shape index: {}]
  %s2 = inlined_call_operand.hbm [shape: bf16[2,128,128], index: 2, kind: input, shape index: {}]
  %s3 = inlined_call_operand.vmem [shape: f32[3,128], index: 3, kind: input, shape index: {}]
  %s4 = inlined_call_operand.hbm [shape: f32[8,128], index: 4, kind: output, shape index: {}]
  %s5 = sld [smem:[#allocation0]]
  $region38: #{tpu_custom_call.1} parent=0
    _
  %s7 = ssub.s32 1, %s5
  %s8 = scalar_select 0, %s7, %s5
  $region1: #{tpu_custom_call.1} parent=0
    #allocation2 [shape = 'u8[4096]{0}', space=vmem, size = 0x1000, scoped, tag = 'input window, operand 0, single buffered']
    #allocation3 [shape = 's32[1]{0}', space=sflag, size = 0x4, scoped, tag = 'scoped memory for tpu_custom_call.1']
    #allocation4 [shape = 's32[1]{0}', space=sflag, size = 0x4, scoped, tag = 'scoped memory for tpu_custom_call.1']
    #allocation5 [shape = 'u8[32768]{0}', space=vmem, size = 0x8000, scoped, tag = 'input window, operand 1, single buffered']
    #allocation6 [shape = 's32[1]{0}', space=sflag, size = 0x4, scoped, tag = 'scoped memory for tpu_custom_call.1']
    #allocation7 [shape = 'u8[65536]{0}', space=vmem, size = 0x10000, scoped, tag = 'input window, operand 2, single buffered']
    #allocation8 [shape = 'u8[4096]{0}', space=vmem, size = 0x1000, scoped, tag = 'output window, operand 0, single buffered']
    %9 = vsyncpa [#allocation3], 0
    %10 = vsyncpa [#allocation6], 0
    %11 = vsyncpa [#allocation4], 0
    // Predicated region
    $region2: #{tpu_custom_call.1} parent=1 // pred_check
      _
    $region3: #{tpu_custom_call.1} parent=1 // pred_check_branch
      %13 = sbr.rel (0) target = $region5
    $region4: #{tpu_custom_call.1} parent=1 // pred_region
      %s15 = ssub.s32 128, 128
      %16 = vsyncadd [#allocation3], %s15
      %s18 = sshll.u32 [#allocation2], 4
      %s19 = int_to_ptr.vmem [resolvable:$true] %s18
      %21 = dma.hbm_to_vmem [thread:$0]  %s0, 128, %s19, [#allocation3]
    $region5: #{tpu_custom_call.1} parent=1 // pred_fallthru
      _
    // Predicated region
    $region6: #{tpu_custom_call.1} parent=1 // pred_check
      _
    $region7: #{tpu_custom_call.1} parent=1 // pred_check_branch
      %23 = sbr.rel (0) target = $region9
    $region8: #{tpu_custom_call.1} parent=1 // pred_region
      %s25 = ssub.s32 1024, 1024
      %26 = vsyncadd [#allocation6], %s25
      %s27 = sshll.u32 [#allocation5], 4
      %s28 = int_to_ptr.vmem [resolvable:$true] %s27
      %33 = dma.hbm_to_vmem [thread:$0]  %s1, 1024, %s28, [#allocation6], 64, 64, 4
    $region9: #{tpu_custom_call.1} parent=1 // pred_fallthru
      _
    // Predicated region
    $region10: #{tpu_custom_call.1} parent=1 // pred_check
      _
    $region11: #{tpu_custom_call.1} parent=1 // pred_check_branch
      %35 = sbr.rel (0) target = $region13
    $region12: #{tpu_custom_call.1} parent=1 // pred_region
      %s37 = ssub.s32 2048, 2048
      %38 = vsyncadd [#allocation6], %s37
      %s39 = sshll.u32 [#allocation7], 4
      %s40 = int_to_ptr.vmem [resolvable:$true] %s39
      %45 = dma.hbm_to_vmem [thread:$0]  %s2, 2048, %s40, [#allocation6], 64, 64, 4
    $region13: #{tpu_custom_call.1} parent=1 // pred_fallthru
      _
    // Predicated region
    $region14: #{tpu_custom_call.1} parent=1 // pred_check
      _
    $region15: #{tpu_custom_call.1} parent=1 // pred_check_branch
      %47 = sbr.rel (0) target = $region17
    $region16: #{tpu_custom_call.1} parent=1 // pred_region
      _
    $region17: #{tpu_custom_call.1} parent=1 // pred_fallthru
      _
    // Predicated region
    $region18: #{tpu_custom_call.1} parent=1 // pred_check
      _
    $region19: #{tpu_custom_call.1} parent=1 // pred_check_branch
      %49 = sbr.rel (0) target = $region21
    $region20: #{tpu_custom_call.1} parent=1 // pred_region
      %50 = dma.done [#allocation3], 128
    $region21: #{tpu_custom_call.1} parent=1 // pred_fallthru
      _
    // Predicated region
    $region22: #{tpu_custom_call.1} parent=1 // pred_check
      _
    $region23: #{tpu_custom_call.1} parent=1 // pred_check_branch
      %52 = sbr.rel (0) target = $region25
    $region24: #{tpu_custom_call.1} parent=1 // pred_region
      %53 = dma.done [#allocation6], 1024
    $region25: #{tpu_custom_call.1} parent=1 // pred_fallthru
      _
    // Predicated region
    $region26: #{tpu_custom_call.1} parent=1 // pred_check
      _
    $region27: #{tpu_custom_call.1} parent=1 // pred_check_branch
      %55 = sbr.rel (0) target = $region29
    $region28: #{tpu_custom_call.1} parent=1 // pred_region
      %56 = dma.done [#allocation6], 2048
    $region29: #{tpu_custom_call.1} parent=1 // pred_fallthru
      _
    %v58 = vld [vmem:[%s3] sm:$0x7]
    %v59 = vld [vmem:[#allocation2] sm:$0xff]
    %v60 = vpack.c.bf16 %v59, %v59
    %v61 = vld [vmem:[#allocation5] sm:$0xf]
    %v62 = vld [vmem:[#allocation5 + $0x4] sm:$0xf]
    %v63 = vld [vmem:[#allocation5 + $0x8] sm:$0xf]
    %v64 = vld [vmem:[#allocation5 + $0xc] sm:$0xf]
    %v65 = vld [vmem:[#allocation5 + $0x10] sm:$0xf]
    %v66 = vld [vmem:[#allocation5 + $0x14] sm:$0xf]
    %v67 = vld [vmem:[#allocation5 + $0x18] sm:$0xf]
    %v68 = vld [vmem:[#allocation5 + $0x1c] sm:$0xf]
    %v69 = vld [vmem:[#allocation5 + $0x20] sm:$0xf]
    %v70 = vld [vmem:[#allocation5 + $0x24] sm:$0xf]
    %v71 = vld [vmem:[#allocation5 + $0x28] sm:$0xf]
    %v72 = vld [vmem:[#allocation5 + $0x2c] sm:$0xf]
    %v73 = vld [vmem:[#allocation5 + $0x30] sm:$0xf]
    %v74 = vld [vmem:[#allocation5 + $0x34] sm:$0xf]
    %v75 = vld [vmem:[#allocation5 + $0x38] sm:$0xf]
    %v76 = vld [vmem:[#allocation5 + $0x3c] sm:$0xf]
    %v77 = vlaneseq
    %v78 = vshrl.u32 %v77, 7
    %v79 = vsub.s32 0, %v78
    %v80 = vrot.slane %v58, %v79
    %v97 = vunpack.c.l.b16 %v61
    %v98 = vunpack.c.l.b16 %v62
    %v99 = vunpack.c.l.b16 %v63
    %v100 = vunpack.c.l.b16 %v64
    %v101 = vunpack.c.l.b16 %v65
    %v102 = vunpack.c.l.b16 %v66
    %v103 = vunpack.c.l.b16 %v67
    %v104 = vunpack.c.l.b16 %v68
    %v105 = vunpack.c.l.b16 %v69
    %v106 = vunpack.c.l.b16 %v70
    %v107 = vunpack.c.l.b16 %v71
    %v108 = vunpack.c.l.b16 %v72
    %v109 = vunpack.c.l.b16 %v73
    %v110 = vunpack.c.l.b16 %v74
    %v111 = vunpack.c.l.b16 %v75
    %v112 = vunpack.c.l.b16 %v76
    %v113 = vpack.c.b16 %v98, %v97
    %v114 = vpack.c.b16 %v100, %v99
    %v115 = vpack.c.b16 %v102, %v101
    %v116 = vpack.c.b16 %v104, %v103
    %v117 = vpack.c.b16 %v106, %v105
    %v118 = vpack.c.b16 %v108, %v107
    %v119 = vpack.c.b16 %v110, %v109
    %v120 = vpack.c.b16 %v112, %v111
    %129 = vmatprep.subr.bf16.mxu0 0
    %130 = vmatpush1.bf16.msra.mxu0 %v113
    %131 = vmatprep.subr.bf16.mxu0 0
    %132 = vmatpush1.bf16.msra.mxu0 %v114
    %133 = vmatprep.subr.bf16.mxu0 0
    %134 = vmatpush1.bf16.msra.mxu0 %v115
    %135 = vmatprep.subr.bf16.mxu0 0
    %136 = vmatpush1.bf16.msra.mxu0 %v116
    %137 = vmatprep.subr.bf16.mxu0 0
    %138 = vmatpush1.bf16.msra.mxu0 %v117
    %139 = vmatprep.subr.bf16.mxu0 0
    %140 = vmatpush1.bf16.msra.mxu0 %v118
    %141 = vmatprep.subr.bf16.mxu0 0
    %142 = vmatpush1.bf16.msra.mxu0 %v119
    %143 = vmatprep.subr.bf16.mxu0 0
    %144 = vmatpush1.bf16.msra.mxu0 %v120
    %145 = vmatprep.subr.bf16.mxu0 0
    %146 = vmatpush1.bf16.msra.mxu0 0
    %147 = vmatprep.subr.bf16.mxu0 0
    %148 = vmatpush1.bf16.msra.mxu0 0
    %149 = vmatprep.subr.bf16.mxu0 0
    %150 = vmatpush1.bf16.msra.mxu0 0
    %151 = vmatprep.subr.bf16.mxu0 0
    %152 = vmatpush1.bf16.msra.mxu0 0
    %153 = vmatprep.subr.bf16.mxu0 0
    %154 = vmatpush1.bf16.msra.mxu0 0
    %155 = vmatprep.subr.bf16.mxu0 0
    %156 = vmatpush1.bf16.msra.mxu0 0
    %157 = vmatprep.subr.bf16.mxu0 0
    %158 = vmatpush1.bf16.msra.mxu0 0
    %159 = vmatprep.subr.bf16.mxu0 0
    %160 = vmatpush1.bf16.msra.mxu0 0
    %161 = vmatprep.mubr.bf16.mxu0 0
    %162 = vmatmul.mubr.bf16.gmra.mrb[0].mxu0 %v60
    %v163 = vpop.f32.mrb[0].mxu0
    %v164 = vadd.f32 %v80, %v163
    %v165 = vpop.f32.mrb[0].mxu0
    %v166 = vpop.f32.mrb[0].mxu0
    %v167 = vpop.f32.mrb[0].mxu0
    %168 = vdwg.mxu0
    %v169 = vsub.f32 0.0, %v164
    %v170 = vmul.f32 %v169, 1.442695
    %v171 = vpow.pop %v170
    %v172 = vadd.f32 %v171, 1.0
    %v173 = vrcp.pop %v172
    %v174 = vmul.f32 1.0, %v173
    %v175 = vmul.f32 %v164, %v174
    %v176 = vpack.c.bf16 %v175, %v175
    %v177 = vld [vmem:[#allocation7] sm:$0xf]
    %v178 = vld [vmem:[#allocation7 + $0x4] sm:$0xf]
    %v179 = vld [vmem:[#allocation7 + $0x8] sm:$0xf]
    %v180 = vld [vmem:[#allocation7 + $0xc] sm:$0xf]
    %v181 = vld [vmem:[#allocation7 + $0x10] sm:$0xf]
    %v182 = vld [vmem:[#allocation7 + $0x14] sm:$0xf]
    %v183 = vld [vmem:[#allocation7 + $0x18] sm:$0xf]
    %v184 = vld [vmem:[#allocation7 + $0x1c] sm:$0xf]
    %v185 = vld [vmem:[#allocation7 + $0x20] sm:$0xf]
    %v186 = vld [vmem:[#allocation7 + $0x24] sm:$0xf]
    %v187 = vld [vmem:[#allocation7 + $0x28] sm:$0xf]
    %v188 = vld [vmem:[#allocation7 + $0x2c] sm:$0xf]
    %v189 = vld [vmem:[#allocation7 + $0x30] sm:$0xf]
    %v190 = vld [vmem:[#allocation7 + $0x34] sm:$0xf]
    %v191 = vld [vmem:[#allocation7 + $0x38] sm:$0xf]
    %v192 = vld [vmem:[#allocation7 + $0x3c] sm:$0xf]
    %v193 = vlaneseq
    %v194 = vshrl.u32 %v193, 7
    %v195 = vsub.s32 1, %v194
    %v196 = vrot.slane %v58, %v195
    %v213 = vunpack.c.l.b16 %v177
    %v214 = vunpack.c.l.b16 %v178
    %v215 = vunpack.c.l.b16 %v179
    %v216 = vunpack.c.l.b16 %v180
    %v217 = vunpack.c.l.b16 %v181
    %v218 = vunpack.c.l.b16 %v182
    %v219 = vunpack.c.l.b16 %v183
    %v220 = vunpack.c.l.b16 %v184
    %v221 = vunpack.c.l.b16 %v185
    %v222 = vunpack.c.l.b16 %v186
    %v223 = vunpack.c.l.b16 %v187
    %v224 = vunpack.c.l.b16 %v188
    %v225 = vunpack.c.l.b16 %v189
    %v226 = vunpack.c.l.b16 %v190
    %v227 = vunpack.c.l.b16 %v191
    %v228 = vunpack.c.l.b16 %v192
    %v229 = vpack.c.b16 %v214, %v213
    %v230 = vpack.c.b16 %v216, %v215
    %v231 = vpack.c.b16 %v218, %v217
    %v232 = vpack.c.b16 %v220, %v219
    %v233 = vpack.c.b16 %v222, %v221
    %v234 = vpack.c.b16 %v224, %v223
    %v235 = vpack.c.b16 %v226, %v225
    %v236 = vpack.c.b16 %v228, %v227
    %245 = vmatprep.subr.bf16.mxu0 0
    %246 = vmatpush1.bf16.msra.mxu0 %v229
    %247 = vmatprep.subr.bf16.mxu0 0
    %248 = vmatpush1.bf16.msra.mxu0 %v230
    %249 = vmatprep.subr.bf16.mxu0 0
    %250 = vmatpush1.bf16.msra.mxu0 %v231
    %251 = vmatprep.subr.bf16.mxu0 0
    %252 = vmatpush1.bf16.msra.mxu0 %v232
    %253 = vmatprep.subr.bf16.mxu0 0
    %254 = vmatpush1.bf16.msra.mxu0 %v233
    %255 = vmatprep.subr.bf16.mxu0 0
    %256 = vmatpush1.bf16.msra.mxu0 %v234
    %257 = vmatprep.subr.bf16.mxu0 0
    %258 = vmatpush1.bf16.msra.mxu0 %v235
    %259 = vmatprep.subr.bf16.mxu0 0
    %260 = vmatpush1.bf16.msra.mxu0 %v236
    %261 = vmatprep.subr.bf16.mxu0 0
    %262 = vmatpush1.bf16.msra.mxu0 0
    %263 = vmatprep.subr.bf16.mxu0 0
    %264 = vmatpush1.bf16.msra.mxu0 0
    %265 = vmatprep.subr.bf16.mxu0 0
    %266 = vmatpush1.bf16.msra.mxu0 0
    %267 = vmatprep.subr.bf16.mxu0 0
    %268 = vmatpush1.bf16.msra.mxu0 0
    %269 = vmatprep.subr.bf16.mxu0 0
    %270 = vmatpush1.bf16.msra.mxu0 0
    %271 = vmatprep.subr.bf16.mxu0 0
    %272 = vmatpush1.bf16.msra.mxu0 0
    %273 = vmatprep.subr.bf16.mxu0 0
    %274 = vmatpush1.bf16.msra.mxu0 0
    %275 = vmatprep.subr.bf16.mxu0 0
    %276 = vmatpush1.bf16.msra.mxu0 0
    %277 = vmatprep.mubr.bf16.mxu0 0
    %278 = vmatmul.mubr.bf16.gmra.mrb[0].mxu0 %v176
    %v279 = vpop.f32.mrb[0].mxu0
    %v280 = vadd.f32 %v196, %v279
    %v281 = vpop.f32.mrb[0].mxu0
    %v282 = vpop.f32.mrb[0].mxu0
    %v283 = vpop.f32.mrb[0].mxu0
    %284 = vdwg.mxu0
    %v285 = vsub.f32 0.0, %v280
    %v286 = vmul.f32 %v285, 1.442695
    %v287 = vpow.pop %v286
    %v288 = vadd.f32 %v287, 1.0
    %v289 = vrcp.pop %v288
    %v290 = vmul.f32 1.0, %v289
    %v291 = vmul.f32 %v280, %v290
    %v292 = vpack.c.bf16 %v291, %v291
    %s293 = scalar_lea.vmem [#allocation7], 64
    %v294 = vld [vmem:[%s293] sm:$0xf]
    %v295 = vld [vmem:[%s293 + $0x4] sm:$0xf]
    %v296 = vld [vmem:[%s293 + $0x8] sm:$0xf]
    %v297 = vld [vmem:[%s293 + $0xc] sm:$0xf]
    %v298 = vld [vmem:[%s293 + $0x10] sm:$0xf]
    %v299 = vld [vmem:[%s293 + $0x14] sm:$0xf]
    %v300 = vld [vmem:[%s293 + $0x18] sm:$0xf]
    %v301 = vld [vmem:[%s293 + $0x1c] sm:$0xf]
    %v302 = vld [vmem:[%s293 + $0x20] sm:$0xf]
    %v303 = vld [vmem:[%s293 + $0x24] sm:$0xf]
    %v304 = vld [vmem:[%s293 + $0x28] sm:$0xf]
    %v305 = vld [vmem:[%s293 + $0x2c] sm:$0xf]
    %v306 = vld [vmem:[%s293 + $0x30] sm:$0xf]
    %v307 = vld [vmem:[%s293 + $0x34] sm:$0xf]
    %v308 = vld [vmem:[%s293 + $0x38] sm:$0xf]
    %v309 = vld [vmem:[%s293 + $0x3c] sm:$0xf]
    %v310 = vlaneseq
    %v311 = vshrl.u32 %v310, 7
    %v312 = vsub.s32 2, %v311
    %v313 = vrot.slane %v58, %v312
    %v330 = vunpack.c.l.b16 %v294
    %v331 = vunpack.c.l.b16 %v295
    %v332 = vunpack.c.l.b16 %v296
    %v333 = vunpack.c.l.b16 %v297
    %v334 = vunpack.c.l.b16 %v298
    %v335 = vunpack.c.l.b16 %v299
    %v336 = vunpack.c.l.b16 %v300
    %v337 = vunpack.c.l.b16 %v301
    %v338 = vunpack.c.l.b16 %v302
    %v339 = vunpack.c.l.b16 %v303
    %v340 = vunpack.c.l.b16 %v304
    %v341 = vunpack.c.l.b16 %v305
    %v342 = vunpack.c.l.b16 %v306
    %v343 = vunpack.c.l.b16 %v307
    %v344 = vunpack.c.l.b16 %v308
    %v345 = vunpack.c.l.b16 %v309
    %v346 = vpack.c.b16 %v331, %v330
    %v347 = vpack.c.b16 %v333, %v332
    %v348 = vpack.c.b16 %v335, %v334
    %v349 = vpack.c.b16 %v337, %v336
    %v350 = vpack.c.b16 %v339, %v338
    %v351 = vpack.c.b16 %v341, %v340
    %v352 = vpack.c.b16 %v343, %v342
    %v353 = vpack.c.b16 %v345, %v344
    %362 = vmatprep.subr.bf16.mxu0 0
    %363 = vmatpush1.bf16.msra.mxu0 %v346
    %364 = vmatprep.subr.bf16.mxu0 0
    %365 = vmatpush1.bf16.msra.mxu0 %v347
    %366 = vmatprep.subr.bf16.mxu0 0
    %367 = vmatpush1.bf16.msra.mxu0 %v348
    %368 = vmatprep.subr.bf16.mxu0 0
    %369 = vmatpush1.bf16.msra.mxu0 %v349
    %370 = vmatprep.subr.bf16.mxu0 0
    %371 = vmatpush1.bf16.msra.mxu0 %v350
    %372 = vmatprep.subr.bf16.mxu0 0
    %373 = vmatpush1.bf16.msra.mxu0 %v351
    %374 = vmatprep.subr.bf16.mxu0 0
    %375 = vmatpush1.bf16.msra.mxu0 %v352
    %376 = vmatprep.subr.bf16.mxu0 0
    %377 = vmatpush1.bf16.msra.mxu0 %v353
    %378 = vmatprep.subr.bf16.mxu0 0
    %379 = vmatpush1.bf16.msra.mxu0 0
    %380 = vmatprep.subr.bf16.mxu0 0
    %381 = vmatpush1.bf16.msra.mxu0 0
    %382 = vmatprep.subr.bf16.mxu0 0
    %383 = vmatpush1.bf16.msra.mxu0 0
    %384 = vmatprep.subr.bf16.mxu0 0
    %385 = vmatpush1.bf16.msra.mxu0 0
    %386 = vmatprep.subr.bf16.mxu0 0
    %387 = vmatpush1.bf16.msra.mxu0 0
    %388 = vmatprep.subr.bf16.mxu0 0
    %389 = vmatpush1.bf16.msra.mxu0 0
    %390 = vmatprep.subr.bf16.mxu0 0
    %391 = vmatpush1.bf16.msra.mxu0 0
    %392 = vmatprep.subr.bf16.mxu0 0
    %393 = vmatpush1.bf16.msra.mxu0 0
    %394 = vmatprep.mubr.bf16.mxu0 0
    %395 = vmatmul.mubr.bf16.gmra.mrb[0].mxu0 %v292
    %v396 = vpop.f32.mrb[0].mxu0
    %v397 = vadd.f32 %v313, %v396
    %v398 = vpop.f32.mrb[0].mxu0
    %v399 = vpop.f32.mrb[0].mxu0
    %v400 = vpop.f32.mrb[0].mxu0
    %401 = vdwg.mxu0
    %402 = vst [vmem:[#allocation8] sm:$0xff] %v397
    // Predicated region
    $region30: #{tpu_custom_call.1} parent=1 // pred_check
      _
    $region31: #{tpu_custom_call.1} parent=1 // pred_check_branch
      %404 = sbr.rel (0) target = $region33
    $region32: #{tpu_custom_call.1} parent=1 // pred_region
      %s406 = ssub.s32 128, 128
      %407 = vsyncadd [#allocation4], %s406
      %s409 = sshll.u32 [#allocation8], 4
      %s410 = int_to_ptr.vmem [resolvable:$true] %s409
      %412 = dma.vmem_to_hbm [thread:$0]  %s410, 128, %s4, [#allocation4]
    $region33: #{tpu_custom_call.1} parent=1 // pred_fallthru
      _
    // Predicated region
    $region34: #{tpu_custom_call.1} parent=1 // pred_check
      _
    $region35: #{tpu_custom_call.1} parent=1 // pred_check_branch
      %414 = sbr.rel (0) target = $region37
    $region36: #{tpu_custom_call.1} parent=1 // pred_region
      %415 = dma.done [#allocation4], 128
    $region37: #{tpu_custom_call.1} parent=1 // pred_fallthru
      _
    %416 = vsyncpa [#allocation3], 1
    %417 = vsyncpa [#allocation6], 1
    %418 = vsyncpa [#allocation4], 1

</llo_original>
